<compile_context>
chip_gen: v6e
topology: v6e:2x2x1
jax: 0.10.0
libtpu: 0.0.40
codegen_flags: <defaults>
</compile_context>

<pallas_src>
import functools

import jax
import jax.numpy as jnp
from jax.experimental import pallas as pl
from jax.experimental.pallas import tpu as pltpu


def _round_up(x, m):
    return ((x + m - 1) // m) * m


def _protein_vae_kernel(x_ref,
                        w1_ref, b1_ref,      # encoder fc
                        wm_ref, bm_ref,      # encoder mean head (lane-padded)
                        wd_ref, bd_ref,      # decoder fc (rows padded to match)
                        wh_ref, bh_ref,      # fused heads [fore|back|mix] (lane-padded)
                        norm_ref, heads_ref,
                        *, n_prot):
    x = x_ref[...]

    # ---------------- Encoder ----------------
    h = jnp.dot(x.astype(w1_ref.dtype), w1_ref[...],
                preferred_element_type=jnp.float32) + b1_ref[...]
    h = jnp.maximum(h, 0.0)

    latent = jnp.dot(h.astype(wm_ref.dtype), wm_ref[...],
                     preferred_element_type=jnp.float32) + bm_ref[...]

    # Padded latent lanes are exactly zero (zero weight cols + zero bias), so
    # the L2 norm over the padded width equals the true norm.
    # torch F.normalize semantics: clamp the norm, don't add eps to the sum.
    l2 = jnp.sqrt(jnp.sum(latent * latent, axis=-1, keepdims=True))
    norm_ref[...] = latent / jnp.maximum(l2, 1e-12)

    # ---------------- Decoder ----------------
    hd = jnp.dot(latent.astype(wd_ref.dtype), wd_ref[...],
                 preferred_element_type=jnp.float32) + bd_ref[...]
    hd = jnp.maximum(hd, 0.0)

    # Single fused head matmul: columns are [rate_fore | rate_back | mixing | pad].
    z = jnp.dot(hd.astype(wh_ref.dtype), wh_ref[...],
                preferred_element_type=jnp.float32) + bh_ref[...]

    lane = jax.lax.broadcasted_iota(jnp.int32, z.shape, dimension=z.ndim - 1)
    fore = jax.nn.softplus(z) + 1.0
    back = jnp.exp(z)
    # Lane-wise select: one dense (tb, n_head_p) store instead of 3 masked ones.
    heads_ref[...] = jnp.where(lane < n_prot, fore,
                               jnp.where(lane < 2 * n_prot, back, z))


def protein_vae_forward(x, params, *, tb=None):
    """Fused ProteinVAE forward. Returns (norm, py_) like the torch module."""
    B, n_input = x.shape
    n_hidden = params["w1"].shape[1]
    n_latent = params["wm"].shape[1]
    n_head = params["wh"].shape[1]          # 3 * num_proteins
    n_prot = n_head // 3

    # Lane-dense outputs: pad output-producing column counts to multiples of
    # 128 with zero columns / zero bias (values in live lanes are unchanged).
    n_latent_p = _round_up(n_latent, 128)
    n_head_p = _round_up(n_head, 128)
    wm = jnp.pad(params["wm"], ((0, 0), (0, n_latent_p - n_latent)))
    bm = jnp.pad(params["bm"], ((0, 0), (0, n_latent_p - n_latent)))
    wd = jnp.pad(params["wd"], ((0, n_latent_p - n_latent), (0, 0)))  # zero rows eat zero lanes
    wh = jnp.pad(params["wh"], ((0, 0), (0, n_head_p - n_head)))
    bh = jnp.pad(params["bh"], ((0, 0), (0, n_head_p - n_head)))

    # Batch tile: multiple of 8 sublanes; modest so double-buffered x tiles +
    # resident weights fit scoped VMEM even on v7x (32 MiB scoped / 64 MiB phys).
    if tb is None:
        tb = min(256, _round_up(B, 8))
    b_pad = _round_up(B, tb)
    if b_pad != B:
        x = jnp.pad(x, ((0, b_pad - B), (0, 0)))
    grid = (b_pad // tb,)

    def batch_map(i):
        return (i, 0)

    def const_map(i):
        return (0, 0)

    args = (x,
            params["w1"], params["b1"],
            wm, bm,
            wd, params["bd"],
            wh, bh)

    in_specs = [pl.BlockSpec((tb, n_input), batch_map)]
    for p in args[1:]:
        in_specs.append(pl.BlockSpec(p.shape, const_map))   # weights stay resident

    out_specs = (pl.BlockSpec((tb, n_latent_p), batch_map),
                 pl.BlockSpec((tb, n_head_p), batch_map))
    out_shape = (jax.ShapeDtypeStruct((b_pad, n_latent_p), jnp.float32),
                 jax.ShapeDtypeStruct((b_pad, n_head_p), jnp.float32))

    flops = 2 * b_pad * (n_input * n_hidden
                         + n_hidden * n_latent_p
                         + n_latent_p * n_hidden
                         + n_hidden * n_head_p)
    bytes_accessed = (int(x.size) * x.dtype.itemsize
                      + sum(int(a.size) * a.dtype.itemsize for a in args[1:])
                      + b_pad * (n_latent_p + n_head_p) * 4)
    transcendentals = b_pad * (2 * n_head_p + 1)   # softplus + exp heads + norm sqrt

    kernel = functools.partial(_protein_vae_kernel, n_prot=n_prot)

    norm_pad, heads_pad = pl.pallas_call(
        kernel,
        out_shape=out_shape,
        grid=grid,
        in_specs=in_specs,
        out_specs=out_specs,
        compiler_params=pltpu.CompilerParams(
            dimension_semantics=("parallel",)),
        cost_estimate=pl.CostEstimate(
            flops=flops,
            transcendentals=transcendentals,
            bytes_accessed=bytes_accessed),
    )(*args)

    norm = norm_pad[:B, :n_latent]
    heads = heads_pad[:B, :n_head]
    py_ = {
        "rate_fore": heads[:, :n_prot],
        "rate_back": heads[:, n_prot:2 * n_prot],
        "mixing": heads[:, 2 * n_prot:],
        "r": params["py_r"],                 # py_['r'] = self.py_r
    }
    return norm, py_


def init_params(key, n_input, n_hidden, n_latent, n_proteins):
    ks = jax.random.split(key, 8)

    def lin(k, fan_in, fan_out, w_dtype=jnp.bfloat16):
        w = (jax.random.normal(k, (fan_in, fan_out), jnp.float32)
             / jnp.sqrt(jnp.asarray(fan_in, jnp.float32))).astype(w_dtype)
        b = jnp.zeros((1, fan_out), jnp.float32)
        return w, b

    w1, b1 = lin(ks[0], n_input, n_hidden)
    wm, bm = lin(ks[1], n_hidden, n_latent)
    wd, bd = lin(ks[2], n_latent, n_hidden)
    wf, bf = lin(ks[3], n_hidden, n_proteins)
    wb, bb = lin(ks[4], n_hidden, n_proteins)
    wmx, bmx = lin(ks[5], n_hidden, n_proteins)
    # Fuse the three protein heads column-wise: [fore | back | mixing].
    wh = jnp.concatenate([wf, wb, wmx], axis=1)
    bh = jnp.concatenate([bf, bb, bmx], axis=1)
    # self.py_r = 2 * torch.rand(num_proteins)
    py_r = 2.0 * jax.random.uniform(ks[6], (n_proteins,), jnp.float32)

    return dict(w1=w1, b1=b1, wm=wm, bm=bm, wd=wd, bd=bd,
                wh=wh, bh=bh, py_r=py_r)


def _ref_forward(x, params):
    """Pure-JAX reference with the same bf16-matmul / f32-accumulate semantics."""
    f32 = jnp.float32
    h = jnp.maximum(jnp.dot(x.astype(params["w1"].dtype), params["w1"],
                            preferred_element_type=f32) + params["b1"], 0.0)
    latent = jnp.dot(h.astype(params["wm"].dtype), params["wm"],
                     preferred_element_type=f32) + params["bm"]
    l2 = jnp.sqrt(jnp.sum(latent * latent, axis=-1, keepdims=True))
    norm = latent / jnp.maximum(l2, 1e-12)
    hd = jnp.maximum(jnp.dot(latent.astype(params["wd"].dtype), params["wd"],
                             preferred_element_type=f32) + params["bd"], 0.0)
    z = jnp.dot(hd.astype(params["wh"].dtype), params["wh"],
                preferred_element_type=f32) + params["bh"]
    n_prot = params["wh"].shape[1] // 3
    fore = jax.nn.softplus(z[:, :n_prot]) + 1.0
    back = jnp.exp(z[:, n_prot:2 * n_prot])
    mix = z[:, 2 * n_prot:]
    return norm, fore, back, mix


if __name__ == "__main__":
    # Small shapes consistent with the module: adata has n_input genes and a
    # protein obsm table with num_proteins columns.
    B, n_input, n_hidden, n_latent, n_proteins = 8, 32, 32, 10, 14

    key = jax.random.PRNGKey(0)
    k_x, k_p = jax.random.split(key)
    # Non-negative "expression"-like input.
    x = jax.random.uniform(k_x, (B, n_input), jnp.float32) * 4.0
    params = init_params(k_p, n_input, n_hidden, n_latent, n_proteins)

    fwd = jax.jit(functools.partial(protein_vae_forward))
    norm, py_ = fwd(x, params)
    jax.block_until_ready(norm)
    jax.block_until_ready(py_["rate_fore"])
    jax.block_until_ready(py_["rate_back"])
    jax.block_until_ready(py_["mixing"])

    assert norm.shape == (B, n_latent)
    assert py_["rate_fore"].shape == (B, n_proteins)
    assert py_["rate_back"].shape == (B, n_proteins)
    assert py_["mixing"].shape == (B, n_proteins)
    assert py_["r"].shape == (n_proteins,)
    assert bool(jnp.all(jnp.isfinite(norm)))
    assert bool(jnp.all(py_["rate_fore"] >= 1.0))
    assert bool(jnp.all(py_["rate_back"] > 0.0))

    # Numerical check against pure-JAX reference (generous tolerance for
    # MXU-vs-XLA accumulation-order differences on bf16 inputs).
    r_norm, r_fore, r_back, r_mix = _ref_forward(x, params)
    assert bool(jnp.allclose(norm, r_norm, atol=5e-2, rtol=5e-2))
    assert bool(jnp.allclose(py_["rate_fore"], r_fore, atol=5e-2, rtol=5e-2))
    assert bool(jnp.allclose(py_["rate_back"], r_back, atol=5e-2, rtol=5e-2))
    assert bool(jnp.allclose(py_["mixing"], r_mix, atol=5e-2, rtol=5e-2))

    print("KERNEL_OK")
</pallas_src>

<mosaic_0001>
module attributes {stable_mosaic.version = 11 : i64} {
  func.func @_protein_vae_kernel(%arg0: i32, %arg1: memref<8x32xf32, #tpu.memory_space<vmem>>, %arg2: memref<32x32xbf16, #tpu.memory_space<vmem>>, %arg3: memref<1x32xf32, #tpu.memory_space<vmem>>, %arg4: memref<32x128xbf16, #tpu.memory_space<vmem>>, %arg5: memref<1x128xf32, #tpu.memory_space<vmem>>, %arg6: memref<128x32xbf16, #tpu.memory_space<vmem>>, %arg7: memref<1x32xf32, #tpu.memory_space<vmem>>, %arg8: memref<32x128xbf16, #tpu.memory_space<vmem>>, %arg9: memref<1x128xf32, #tpu.memory_space<vmem>>, %arg10: memref<8x128xf32, #tpu.memory_space<vmem>>, %arg11: memref<8x128xf32, #tpu.memory_space<vmem>>) attributes {dimension_semantics = [#tpu.dimension_semantics<parallel>], iteration_bounds = array<i64: 1>, scalar_prefetch = 0 : i64, scratch_operands = 0 : i64, tpu.core_type = #tpu.core_type<tc>, window_params = [{transform_indices = @transform_0, window_bounds = array<i64: 8, 32>}, {pipeline_mode = #tpu.pipeline_mode<synchronous>, transform_indices = @transform_1, window_bounds = array<i64: 32, 32>}, {pipeline_mode = #tpu.pipeline_mode<synchronous>, transform_indices = @transform_2, window_bounds = array<i64: 1, 32>}, {pipeline_mode = #tpu.pipeline_mode<synchronous>, transform_indices = @transform_3, window_bounds = array<i64: 32, 128>}, {pipeline_mode = #tpu.pipeline_mode<synchronous>, transform_indices = @transform_4, window_bounds = array<i64: 1, 128>}, {pipeline_mode = #tpu.pipeline_mode<synchronous>, transform_indices = @transform_5, window_bounds = array<i64: 128, 32>}, {pipeline_mode = #tpu.pipeline_mode<synchronous>, transform_indices = @transform_6, window_bounds = array<i64: 1, 32>}, {pipeline_mode = #tpu.pipeline_mode<synchronous>, transform_indices = @transform_7, window_bounds = array<i64: 32, 128>}, {pipeline_mode = #tpu.pipeline_mode<synchronous>, transform_indices = @transform_8, window_bounds = array<i64: 1, 128>}, {transform_indices = @transform_9, window_bounds = array<i64: 8, 128>}, {transform_indices = @transform_10, window_bounds = array<i64: 8, 128>}]} {
    %c0 = arith.constant 0 : index
    %c0_0 = arith.constant 0 : index
    %0 = vector.load %arg1[%c0, %c0_0] : memref<8x32xf32, #tpu.memory_space<vmem>>, vector<8x32xf32>
    %1 = arith.truncf %0 : vector<8x32xf32> to vector<8x32xbf16>
    %c0_1 = arith.constant 0 : index
    %c0_2 = arith.constant 0 : index
    %2 = vector.load %arg2[%c0_1, %c0_2] : memref<32x32xbf16, #tpu.memory_space<vmem>>, vector<32x32xbf16>
    %cst = arith.constant dense<0.000000e+00> : vector<8x32xf32>
    %3 = tpu.matmul %1, %2, %cst {dimension_numbers = #tpu.dot_dimension_numbers<[1], [0], [0], [1], [0, 0, 1, 1], [], []>} : vector<8x32xbf16>, vector<32x32xbf16>, vector<8x32xf32> -> vector<8x32xf32>
    %c0_3 = arith.constant 0 : index
    %c0_4 = arith.constant 0 : index
    %4 = vector.load %arg3[%c0_3, %c0_4] : memref<1x32xf32, #tpu.memory_space<vmem>>, vector<1x32xf32>
    %5 = vector.broadcast %4 : vector<1x32xf32> to vector<8x32xf32>
    %6 = arith.addf %3, %5 : vector<8x32xf32>
    %cst_5 = arith.constant 0.000000e+00 : f32
    %7 = vector.broadcast %cst_5 : f32 to vector<8x32xf32>
    %8 = arith.maximumf %6, %7 : vector<8x32xf32>
    %9 = arith.truncf %8 : vector<8x32xf32> to vector<8x32xbf16>
    %c0_6 = arith.constant 0 : index
    %c0_7 = arith.constant 0 : index
    %10 = vector.load %arg4[%c0_6, %c0_7] : memref<32x128xbf16, #tpu.memory_space<vmem>>, vector<32x128xbf16>
    %cst_8 = arith.constant dense<0.000000e+00> : vector<8x128xf32>
    %11 = tpu.matmul %9, %10, %cst_8 {dimension_numbers = #tpu.dot_dimension_numbers<[1], [0], [0], [1], [0, 0, 1, 1], [], []>} : vector<8x32xbf16>, vector<32x128xbf16>, vector<8x128xf32> -> vector<8x128xf32>
    %c0_9 = arith.constant 0 : index
    %c0_10 = arith.constant 0 : index
    %12 = vector.load %arg5[%c0_9, %c0_10] : memref<1x128xf32, #tpu.memory_space<vmem>>, vector<1x128xf32>
    %13 = vector.broadcast %12 : vector<1x128xf32> to vector<8x128xf32>
    %14 = arith.addf %11, %13 : vector<8x128xf32>
    %15 = arith.mulf %14, %14 : vector<8x128xf32>
    %cst_11 = arith.constant dense<0.000000e+00> : vector<8xf32>
    %16 = vector.multi_reduction <add>, %15, %cst_11 [1] : vector<8x128xf32> to vector<8xf32>
    %17 = vector.shape_cast %16 : vector<8xf32> to vector<8x1xf32>
    %18 = math.sqrt %17 : vector<8x1xf32>
    %cst_12 = arith.constant 9.99999996E-13 : f32
    %19 = vector.broadcast %cst_12 : f32 to vector<8x1xf32>
    %20 = arith.maximumf %18, %19 : vector<8x1xf32>
    %21 = vector.broadcast %20 : vector<8x1xf32> to vector<8x128xf32>
    %22 = arith.divf %14, %21 : vector<8x128xf32>
    %c0_13 = arith.constant 0 : index
    %c0_14 = arith.constant 0 : index
    %23 = vector.load %arg10[%c0_13, %c0_14] : memref<8x128xf32, #tpu.memory_space<vmem>>, vector<8x128xf32>
    tpu.vector_store %arg10[%c0_13, %c0_14], %22 {strides = array<i32>} : memref<8x128xf32, #tpu.memory_space<vmem>>, vector<8x128xf32>,
    %24 = arith.truncf %14 : vector<8x128xf32> to vector<8x128xbf16>
    %c0_15 = arith.constant 0 : index
    %c0_16 = arith.constant 0 : index
    %25 = vector.load %arg6[%c0_15, %c0_16] : memref<128x32xbf16, #tpu.memory_space<vmem>>, vector<128x32xbf16>
    %cst_17 = arith.constant dense<0.000000e+00> : vector<8x32xf32>
    %26 = tpu.matmul %24, %25, %cst_17 {dimension_numbers = #tpu.dot_dimension_numbers<[1], [0], [0], [1], [0, 0, 1, 1], [], []>} : vector<8x128xbf16>, vector<128x32xbf16>, vector<8x32xf32> -> vector<8x32xf32>
    %c0_18 = arith.constant 0 : index
    %c0_19 = arith.constant 0 : index
    %27 = vector.load %arg7[%c0_18, %c0_19] : memref<1x32xf32, #tpu.memory_space<vmem>>, vector<1x32xf32>
    %28 = vector.broadcast %27 : vector<1x32xf32> to vector<8x32xf32>
    %29 = arith.addf %26, %28 : vector<8x32xf32>
    %cst_20 = arith.constant 0.000000e+00 : f32
    %30 = vector.broadcast %cst_20 : f32 to vector<8x32xf32>
    %31 = arith.maximumf %29, %30 : vector<8x32xf32>
    %32 = arith.truncf %31 : vector<8x32xf32> to vector<8x32xbf16>
    %c0_21 = arith.constant 0 : index
    %c0_22 = arith.constant 0 : index
    %33 = vector.load %arg8[%c0_21, %c0_22] : memref<32x128xbf16, #tpu.memory_space<vmem>>, vector<32x128xbf16>
    %cst_23 = arith.constant dense<0.000000e+00> : vector<8x128xf32>
    %34 = tpu.matmul %32, %33, %cst_23 {dimension_numbers = #tpu.dot_dimension_numbers<[1], [0], [0], [1], [0, 0, 1, 1], [], []>} : vector<8x32xbf16>, vector<32x128xbf16>, vector<8x128xf32> -> vector<8x128xf32>
    %c0_24 = arith.constant 0 : index
    %c0_25 = arith.constant 0 : index
    %35 = vector.load %arg9[%c0_24, %c0_25] : memref<1x128xf32, #tpu.memory_space<vmem>>, vector<1x128xf32>
    %36 = vector.broadcast %35 : vector<1x128xf32> to vector<8x128xf32>
    %37 = arith.addf %34, %36 : vector<8x128xf32>
    %38 = tpu.iota {dimensions = array<i32: 1>} : vector<8x128xi32>
    %cst_26 = arith.constant 0.000000e+00 : f32
    %39 = vector.broadcast %cst_26 : f32 to vector<8x128xf32>
    %40 = arith.maximumf %37, %39 : vector<8x128xf32>
    %41 = vector.broadcast %cst_26 : f32 to vector<8x128xf32>
    %42 = arith.subf %37, %41 : vector<8x128xf32>
    %43 = arith.cmpf one, %42, %42 : vector<8x128xf32>
    %44 = vector.broadcast %cst_26 : f32 to vector<8x128xf32>
    %45 = arith.addf %37, %44 : vector<8x128xf32>
    %46 = math.absf %42 : vector<8x128xf32>
    %cst_27 = arith.constant 0.000000e+00 : f32
    %47 = vector.broadcast %cst_27 : f32 to vector<8x128xf32>
    %48 = arith.subf %47, %46 : vector<8x128xf32>
    %49 = math.exp %48 : vector<8x128xf32>
    %50 = math.log1p %49 : vector<8x128xf32>
    %51 = arith.addf %40, %50 : vector<8x128xf32>
    %52 = arith.select %43, %45, %51 : vector<8x128xi1>, vector<8x128xf32>
    %cst_28 = arith.constant 1.000000e+00 : f32
    %53 = vector.broadcast %cst_28 : f32 to vector<8x128xf32>
    %54 = arith.addf %52, %53 : vector<8x128xf32>
    %55 = math.exp %37 : vector<8x128xf32>
    %c14_i32 = arith.constant 14 : i32
    %56 = vector.broadcast %c14_i32 : i32 to vector<8x128xi32>
    %57 = arith.cmpi slt, %38, %56 : vector<8x128xi32>
    %c28_i32 = arith.constant 28 : i32
    %58 = vector.broadcast %c28_i32 : i32 to vector<8x128xi32>
    %59 = arith.cmpi slt, %38, %58 : vector<8x128xi32>
    %60 = arith.select %59, %55, %37 : vector<8x128xi1>, vector<8x128xf32>
    %61 = arith.select %57, %54, %60 : vector<8x128xi1>, vector<8x128xf32>
    %c0_29 = arith.constant 0 : index
    %c0_30 = arith.constant 0 : index
    %62 = vector.load %arg11[%c0_29, %c0_30] : memref<8x128xf32, #tpu.memory_space<vmem>>, vector<8x128xf32>
    tpu.vector_store %arg11[%c0_29, %c0_30], %61 {strides = array<i32>} : memref<8x128xf32, #tpu.memory_space<vmem>>, vector<8x128xf32>,
    return
  }
  func.func @transform_0(%arg0: i32) -> (i32, i32) {
    %c0_i32 = arith.constant 0 : i32
    %c0_i32_0 = arith.constant 0 : i32
    return %arg0, %c0_i32 : i32, i32
  }
  func.func @transform_1(%arg0: i32) -> (i32, i32) {
    %c0_i32 = arith.constant 0 : i32
    %c0_i32_0 = arith.constant 0 : i32
    %c0_i32_1 = arith.constant 0 : i32
    return %c0_i32, %c0_i32_0 : i32, i32
  }
  func.func @transform_2(%arg0: i32) -> (i32, i32) {
    %c0_i32 = arith.constant 0 : i32
    %c0_i32_0 = arith.constant 0 : i32
    %c0_i32_1 = arith.constant 0 : i32
    return %c0_i32, %c0_i32_0 : i32, i32
  }
  func.func @transform_3(%arg0: i32) -> (i32, i32) {
    %c0_i32 = arith.constant 0 : i32
    %c0_i32_0 = arith.constant 0 : i32
    %c0_i32_1 = arith.constant 0 : i32
    return %c0_i32, %c0_i32_0 : i32, i32
  }
  func.func @transform_4(%arg0: i32) -> (i32, i32) {
    %c0_i32 = arith.constant 0 : i32
    %c0_i32_0 = arith.constant 0 : i32
    %c0_i32_1 = arith.constant 0 : i32
    return %c0_i32, %c0_i32_0 : i32, i32
  }
  func.func @transform_5(%arg0: i32) -> (i32, i32) {
    %c0_i32 = arith.constant 0 : i32
    %c0_i32_0 = arith.constant 0 : i32
    %c0_i32_1 = arith.constant 0 : i32
    return %c0_i32, %c0_i32_0 : i32, i32
  }
  func.func @transform_6(%arg0: i32) -> (i32, i32) {
    %c0_i32 = arith.constant 0 : i32
    %c0_i32_0 = arith.constant 0 : i32
    %c0_i32_1 = arith.constant 0 : i32
    return %c0_i32, %c0_i32_0 : i32, i32
  }
  func.func @transform_7(%arg0: i32) -> (i32, i32) {
    %c0_i32 = arith.constant 0 : i32
    %c0_i32_0 = arith.constant 0 : i32
    %c0_i32_1 = arith.constant 0 : i32
    return %c0_i32, %c0_i32_0 : i32, i32
  }
  func.func @transform_8(%arg0: i32) -> (i32, i32) {
    %c0_i32 = arith.constant 0 : i32
    %c0_i32_0 = arith.constant 0 : i32
    %c0_i32_1 = arith.constant 0 : i32
    return %c0_i32, %c0_i32_0 : i32, i32
  }
  func.func @transform_9(%arg0: i32) -> (i32, i32) {
    %c0_i32 = arith.constant 0 : i32
    %c0_i32_0 = arith.constant 0 : i32
    return %arg0, %c0_i32 : i32, i32
  }
  func.func @transform_10(%arg0: i32) -> (i32, i32) {
    %c0_i32 = arith.constant 0 : i32
    %c0_i32_0 = arith.constant 0 : i32
    return %arg0, %c0_i32 : i32, i32
  }
}

</mosaic_0001>

<llo_original>
// kernel: protein_vae_forward.1
$region0: #{protein_vae_forward.1}
  #allocation0 [shape = 'u32[]', space=smem, size = 0x4, offset = 0x4, fixed_abs, tag = 'smem constant byte address 0x4 - core index']
  #allocation1 [shape = 'u32[144,128]{1,0:T(1,128)}', space=vmem, size = 0x12000, scoped, tag = 'internal scratch']
  %s0 = inlined_call_operand.vmem [shape: f32[8,32], index: 0, kind: input, shape index: {}]
  %s1 = inlined_call_operand.vmem [shape: bf16[32,32], index: 1, kind: input, shape index: {}]
  %s2 = inlined_call_operand.vmem [shape: f32[1,32], index: 2, kind: input, shape index: {}]
  %s3 = inlined_call_operand.vmem [shape: bf16[32,128], index: 3, kind: input, shape index: {}]
  %s4 = inlined_call_operand.vmem [shape: f32[1,128], index: 4, kind: input, shape index: {}]
  %s5 = inlined_call_operand.vmem [shape: bf16[128,32], index: 5, kind: input, shape index: {}]
  %s6 = inlined_call_operand.vmem [shape: f32[1,32], index: 6, kind: input, shape index: {}]
  %s7 = inlined_call_operand.vmem [shape: bf16[32,128], index: 7, kind: input, shape index: {}]
  %s8 = inlined_call_operand.vmem [shape: f32[1,128], index: 8, kind: input, shape index: {}]
  %s9 = inlined_call_operand.hbm [shape: f32[8,128], index: 9, kind: output, shape index: {0}]
  %s10 = inlined_call_operand.vmem [shape: f32[8,128], index: 10, kind: output, shape index: {1}]
  %11 = xla_tuple %s9, %s10
  %s12 = sld [smem:[#allocation0]]
  $region54: #{protein_vae_forward.1} parent=0
    _
  %s14 = ssub.s32 1, %s12
  %s15 = scalar_select 0, %s14, %s12
  $region1: #{protein_vae_forward.1} parent=0
    #allocation2 [shape = 'u8[4096]{0}', space=vmem, size = 0x1000, scoped, tag = 'output window, operand 0, single buffered']
    #allocation3 [shape = 's32[1]{0}', space=sflag, size = 0x4, scoped, tag = 'scoped memory for protein_vae_forward.1']
    %16 = vsyncpa [#allocation3], 0
    // Predicated region
    $region2: #{protein_vae_forward.1} parent=1 // pred_check
      _
    $region3: #{protein_vae_forward.1} parent=1 // pred_check_branch
      %18 = sbr.rel (0) target = $region5
    $region4: #{protein_vae_forward.1} parent=1 // pred_region
      _
    $region5: #{protein_vae_forward.1} parent=1 // pred_fallthru
      _
    // Predicated region
    $region6: #{protein_vae_forward.1} parent=1 // pred_check
      _
    $region7: #{protein_vae_forward.1} parent=1 // pred_check_branch
      %20 = sbr.rel (0) target = $region9
    $region8: #{protein_vae_forward.1} parent=1 // pred_region
      _
    $region9: #{protein_vae_forward.1} parent=1 // pred_fallthru
      _
    // Predicated region
    $region10: #{protein_vae_forward.1} parent=1 // pred_check
      _
    $region11: #{protein_vae_forward.1} parent=1 // pred_check_branch
      %22 = sbr.rel (0) target = $region13
    $region12: #{protein_vae_forward.1} parent=1 // pred_region
      _
    $region13: #{protein_vae_forward.1} parent=1 // pred_fallthru
      _
    // Predicated region
    $region14: #{protein_vae_forward.1} parent=1 // pred_check
      _
    $region15: #{protein_vae_forward.1} parent=1 // pred_check_branch
      %24 = sbr.rel (0) target = $region17
    $region16: #{protein_vae_forward.1} parent=1 // pred_region
      _
    $region17: #{protein_vae_forward.1} parent=1 // pred_fallthru
      _
    // Predicated region
    $region18: #{protein_vae_forward.1} parent=1 // pred_check
      _
    $region19: #{protein_vae_forward.1} parent=1 // pred_check_branch
      %26 = sbr.rel (0) target = $region21
    $region20: #{protein_vae_forward.1} parent=1 // pred_region
      _
    $region21: #{protein_vae_forward.1} parent=1 // pred_fallthru
      _
    // Predicated region
    $region22: #{protein_vae_forward.1} parent=1 // pred_check
      _
    $region23: #{protein_vae_forward.1} parent=1 // pred_check_branch
      %28 = sbr.rel (0) target = $region25
    $region24: #{protein_vae_forward.1} parent=1 // pred_region
      _
    $region25: #{protein_vae_forward.1} parent=1 // pred_fallthru
      _
    // Predicated region
    $region26: #{protein_vae_forward.1} parent=1 // pred_check
      _
    $region27: #{protein_vae_forward.1} parent=1 // pred_check_branch
      %30 = sbr.rel (0) target = $region29
    $region28: #{protein_vae_forward.1} parent=1 // pred_region
      _
    $region29: #{protein_vae_forward.1} parent=1 // pred_fallthru
      _
    // Predicated region
    $region30: #{protein_vae_forward.1} parent=1 // pred_check
      _
    $region31: #{protein_vae_forward.1} parent=1 // pred_check_branch
      %32 = sbr.rel (0) target = $region33
    $region32: #{protein_vae_forward.1} parent=1 // pred_region
      _
    $region33: #{protein_vae_forward.1} parent=1 // pred_fallthru
      _
    // Predicated region
    $region34: #{protein_vae_forward.1} parent=1 // pred_check
      _
    $region35: #{protein_vae_forward.1} parent=1 // pred_check_branch
      %34 = sbr.rel (0) target = $region37
    $region36: #{protein_vae_forward.1} parent=1 // pred_region
      _
    $region37: #{protein_vae_forward.1} parent=1 // pred_fallthru
      _
    %v36 = vld [vmem:[%s0] sm:$0xff]
    %v37 = vpack.c.bf16 %v36, %v36
    %v38 = vld [vmem:[%s1] sm:$0xf]
    %v39 = vld [vmem:[%s1 + $0x4] sm:$0xf]
    %v40 = vld [vmem:[%s1 + $0x8] sm:$0xf]
    %v41 = vld [vmem:[%s1 + $0xc] sm:$0xf]
    %v42 = vld [vmem:[%s2] sm:$0x1]
    %v44 = vlaneseq
    %v45 = vshrl.u32 %v44, 7
    %v46 = vsub.s32 0, %v45
    %v47 = vrot.slane %v42, %v46
    %v53 = vunpack.c.l.b16 %v38
    %v54 = vunpack.c.l.b16 %v39
    %v55 = vunpack.c.l.b16 %v40
    %v56 = vunpack.c.l.b16 %v41
    %v57 = vpack.c.b16 %v54, %v53
    %v58 = vpack.c.b16 %v56, %v55
    %vm61 = vcmask 261120
    %v63 = vsel %vm61, %v37, 0
    %65 = vmatprep.subr.bf16.mxu0 0
    %66 = vmatpush1.bf16.msra.mxu0 0
    %67 = vmatprep.subr.bf16.mxu0 0
    %68 = vmatpush1.bf16.msra.mxu0 0
    %69 = vmatprep.subr.bf16.mxu0 0
    %70 = vmatpush1.bf16.msra.mxu0 0
    %71 = vmatprep.subr.bf16.mxu0 0
    %72 = vmatpush1.bf16.msra.mxu0 0
    %73 = vmatprep.subr.bf16.mxu0 0
    %74 = vmatpush1.bf16.msra.mxu0 0
    %75 = vmatprep.subr.bf16.mxu0 0
    %76 = vmatpush1.bf16.msra.mxu0 0
    %77 = vmatprep.subr.bf16.mxu0 0
    %78 = vmatpush1.bf16.msra.mxu0 %v58
    %79 = vmatprep.subr.bf16.mxu0 0
    %80 = vmatpush1.bf16.msra.mxu0 %v57
    %81 = vmatprep.subr.bf16.mxu0 0
    %82 = vmatpush2.bf16.msra.mxu0 0
    %83 = vmatprep.subr.bf16.mxu0 0
    %84 = vmatpush2.bf16.msra.mxu0 0
    %85 = vmatprep.subr.bf16.mxu0 0
    %86 = vmatpush2.bf16.msra.mxu0 0
    %87 = vmatprep.subr.bf16.mxu0 0
    %88 = vmatpush2.bf16.msra.mxu0 0
    %89 = vmatprep.subr.bf16.mxu0 0
    %90 = vmatpush2.bf16.msra.mxu0 0
    %91 = vmatprep.subr.bf16.mxu0 0
    %92 = vmatpush2.bf16.msra.mxu0 0
    %93 = vmatprep.subr.bf16.mxu0 0
    %94 = vmatpush2.bf16.msra.mxu0 0
    %95 = vmatprep.subr.bf16.mxu0 0
    %96 = vmatpush2.bf16.msra.mxu0 0
    %97 = vmatprep.mubr.bf16.mxu0 0
    %98 = vmatmul.mubr.bf16.gmra.mxu0 %v63
    %v99 = vpop.f32.mrf.mxu0
    %v100 = vadd.f32 %v47, %v99
    %v101 = vpop.f32.mrf.mxu0
    %v102 = vpop.f32.mrf.mxu0
    %v103 = vpop.f32.mrf.mxu0
    %104 = vdwg.mxu0
    %v105 = vmax.f32 %v100, 0.0
    %v106 = vpack.c.bf16 %v105, %v105
    %v107 = vld [vmem:[%s3] sm:$0xf]
    %v108 = vld [vmem:[%s3 + $0x4] sm:$0xf]
    %v109 = vld [vmem:[%s3 + $0x8] sm:$0xf]
    %v110 = vld [vmem:[%s3 + $0xc] sm:$0xf]
    %v111 = vld [vmem:[%s4] sm:$0x1]
    %v113 = vlaneseq
    %v114 = vshrl.u32 %v113, 7
    %v115 = vsub.s32 0, %v114
    %v116 = vrot.slane %v111, %v115
    %v122 = vunpack.c.l.b16 %v107
    %v123 = vunpack.c.l.b16 %v108
    %v124 = vunpack.c.l.b16 %v109
    %v125 = vunpack.c.l.b16 %v110
    %v126 = vpack.c.b16 %v123, %v122
    %v127 = vpack.c.b16 %v125, %v124
    %v131 = vsel %vm61, %v106, 0
    %133 = vmatprep.subr.bf16.mxu0 0
    %134 = vmatpush1.bf16.msra.mxu0 0
    %135 = vmatprep.subr.bf16.mxu0 0
    %136 = vmatpush1.bf16.msra.mxu0 0
    %137 = vmatprep.subr.bf16.mxu0 0
    %138 = vmatpush1.bf16.msra.mxu0 0
    %139 = vmatprep.subr.bf16.mxu0 0
    %140 = vmatpush1.bf16.msra.mxu0 0
    %141 = vmatprep.subr.bf16.mxu0 0
    %142 = vmatpush1.bf16.msra.mxu0 0
    %143 = vmatprep.subr.bf16.mxu0 0
    %144 = vmatpush1.bf16.msra.mxu0 0
    %145 = vmatprep.subr.bf16.mxu0 0
    %146 = vmatpush1.bf16.msra.mxu0 %v127
    %147 = vmatprep.subr.bf16.mxu0 0
    %148 = vmatpush1.bf16.msra.mxu0 %v126
    %149 = vmatprep.subr.bf16.mxu0 0
    %150 = vmatpush2.bf16.msra.mxu0 0
    %151 = vmatprep.subr.bf16.mxu0 0
    %152 = vmatpush2.bf16.msra.mxu0 0
    %153 = vmatprep.subr.bf16.mxu0 0
    %154 = vmatpush2.bf16.msra.mxu0 0
    %155 = vmatprep.subr.bf16.mxu0 0
    %156 = vmatpush2.bf16.msra.mxu0 0
    %157 = vmatprep.subr.bf16.mxu0 0
    %158 = vmatpush2.bf16.msra.mxu0 0
    %159 = vmatprep.subr.bf16.mxu0 0
    %160 = vmatpush2.bf16.msra.mxu0 0
    %161 = vmatprep.subr.bf16.mxu0 0
    %162 = vmatpush2.bf16.msra.mxu0 0
    %163 = vmatprep.subr.bf16.mxu0 0
    %164 = vmatpush2.bf16.msra.mxu0 0
    %165 = vmatprep.mubr.bf16.mxu0 0
    %166 = vmatmul.mubr.bf16.gmra.mxu0 %v131
    %v167 = vpop.f32.mrf.mxu0
    %v168 = vadd.f32 %v116, %v167
    %v169 = vpop.f32.mrf.mxu0
    %v170 = vpop.f32.mrf.mxu0
    %v171 = vpop.f32.mrf.mxu0
    %172 = vdwg.mxu0
    %v173 = vmul.f32 %v168, %v168
    %174 = vadd.xlane.f32.xlu0 %v173
    %v175 = vpop.xlane.xlu0 %174
    %v176 = vrsqrt.pop %v175
    %v177 = vmul.f32 %v175, %v176
    %vm178 = vcmp.eq.f32.partialorder %v175, inf
    %v179 = vsel %vm178, %v175, %v177
    %vm180 = vcmp.eq.f32.partialorder %v175, 0.0
    %v181 = vand.u32 %v175, 2147483648
    %v182 = vsel %vm180, %v181, %v179
    %v183 = vmax.f32 %v182, 1e-12
    %v184 = vrcp.pop %v183
    %v185 = vmul.f32 %v168, %v184
    %186 = vst [vmem:[#allocation2] sm:$0xff] %v185
    %v187 = vpack.c.bf16 %v168, %v168
    %v188 = vld [vmem:[%s5] sm:$0xf]
    %v189 = vld [vmem:[%s5 + $0x4] sm:$0xf]
    %v190 = vld [vmem:[%s5 + $0x8] sm:$0xf]
    %v191 = vld [vmem:[%s5 + $0xc] sm:$0xf]
    %v192 = vld [vmem:[%s5 + $0x10] sm:$0xf]
    %v193 = vld [vmem:[%s5 + $0x14] sm:$0xf]
    %v194 = vld [vmem:[%s5 + $0x18] sm:$0xf]
    %v195 = vld [vmem:[%s5 + $0x1c] sm:$0xf]
    %v196 = vld [vmem:[%s5 + $0x20] sm:$0xf]
    %v197 = vld [vmem:[%s5 + $0x24] sm:$0xf]
    %v198 = vld [vmem:[%s5 + $0x28] sm:$0xf]
    %v199 = vld [vmem:[%s5 + $0x2c] sm:$0xf]
    %v200 = vld [vmem:[%s5 + $0x30] sm:$0xf]
    %v201 = vld [vmem:[%s5 + $0x34] sm:$0xf]
    %v202 = vld [vmem:[%s5 + $0x38] sm:$0xf]
    %v203 = vld [vmem:[%s5 + $0x3c] sm:$0xf]
    %v204 = vld [vmem:[%s6] sm:$0x1]
    %v206 = vlaneseq
    %v207 = vshrl.u32 %v206, 7
    %v208 = vsub.s32 0, %v207
    %v209 = vrot.slane %v204, %v208
    %v227 = vunpack.c.l.b16 %v188
    %v228 = vunpack.c.l.b16 %v189
    %v229 = vunpack.c.l.b16 %v190
    %v230 = vunpack.c.l.b16 %v191
    %v231 = vunpack.c.l.b16 %v192
    %v232 = vunpack.c.l.b16 %v193
    %v233 = vunpack.c.l.b16 %v194
    %v234 = vunpack.c.l.b16 %v195
    %v235 = vunpack.c.l.b16 %v196
    %v236 = vunpack.c.l.b16 %v197
    %v237 = vunpack.c.l.b16 %v198
    %v238 = vunpack.c.l.b16 %v199
    %v239 = vunpack.c.l.b16 %v200
    %v240 = vunpack.c.l.b16 %v201
    %v241 = vunpack.c.l.b16 %v202
    %v242 = vunpack.c.l.b16 %v203
    %v243 = vpack.c.b16 %v228, %v227
    %v244 = vpack.c.b16 %v230, %v229
    %v245 = vpack.c.b16 %v232, %v231
    %v246 = vpack.c.b16 %v234, %v233
    %v247 = vpack.c.b16 %v236, %v235
    %v248 = vpack.c.b16 %v238, %v237
    %v249 = vpack.c.b16 %v240, %v239
    %v250 = vpack.c.b16 %v242, %v241
    %259 = vmatprep.subr.bf16.mxu0 0
    %260 = vmatpush1.bf16.msra.mxu0 %v250
    %261 = vmatprep.subr.bf16.mxu0 0
    %262 = vmatpush1.bf16.msra.mxu0 %v249
    %263 = vmatprep.subr.bf16.mxu0 0
    %264 = vmatpush1.bf16.msra.mxu0 %v248
    %265 = vmatprep.subr.bf16.mxu0 0
    %266 = vmatpush1.bf16.msra.mxu0 %v247
    %267 = vmatprep.subr.bf16.mxu0 0
    %268 = vmatpush1.bf16.msra.mxu0 %v246
    %269 = vmatprep.subr.bf16.mxu0 0
    %270 = vmatpush1.bf16.msra.mxu0 %v245
    %271 = vmatprep.subr.bf16.mxu0 0
    %272 = vmatpush1.bf16.msra.mxu0 %v244
    %273 = vmatprep.subr.bf16.mxu0 0
    %274 = vmatpush1.bf16.msra.mxu0 %v243
    %275 = vmatprep.subr.bf16.mxu0 0
    %276 = vmatpush2.bf16.msra.mxu0 0
    %277 = vmatprep.subr.bf16.mxu0 0
    %278 = vmatpush2.bf16.msra.mxu0 0
    %279 = vmatprep.subr.bf16.mxu0 0
    %280 = vmatpush2.bf16.msra.mxu0 0
    %281 = vmatprep.subr.bf16.mxu0 0
    %282 = vmatpush2.bf16.msra.mxu0 0
    %283 = vmatprep.subr.bf16.mxu0 0
    %284 = vmatpush2.bf16.msra.mxu0 0
    %285 = vmatprep.subr.bf16.mxu0 0
    %286 = vmatpush2.bf16.msra.mxu0 0
    %287 = vmatprep.subr.bf16.mxu0 0
    %288 = vmatpush2.bf16.msra.mxu0 0
    %289 = vmatprep.subr.bf16.mxu0 0
    %290 = vmatpush2.bf16.msra.mxu0 0
    %291 = vmatprep.mubr.bf16.mxu0 0
    %292 = vmatmul.mubr.bf16.gmra.mxu0 %v187
    %v293 = vpop.f32.mrf.mxu0
    %v294 = vadd.f32 %v209, %v293
    %v295 = vpop.f32.mrf.mxu0
    %v296 = vpop.f32.mrf.mxu0
    %v297 = vpop.f32.mrf.mxu0
    %298 = vdwg.mxu0
    %v299 = vmax.f32 %v294, 0.0
    %v300 = vpack.c.bf16 %v299, %v299
    %v301 = vld [vmem:[%s7] sm:$0xf]
    %v302 = vld [vmem:[%s7 + $0x4] sm:$0xf]
    %v303 = vld [vmem:[%s7 + $0x8] sm:$0xf]
    %v304 = vld [vmem:[%s7 + $0xc] sm:$0xf]
    %v305 = vld [vmem:[%s8] sm:$0x1]
    %v307 = vlaneseq
    %v308 = vshrl.u32 %v307, 7
    %v309 = vsub.s32 0, %v308
    %v310 = vrot.slane %v305, %v309
    %v316 = vunpack.c.l.b16 %v301
    %v317 = vunpack.c.l.b16 %v302
    %v318 = vunpack.c.l.b16 %v303
    %v319 = vunpack.c.l.b16 %v304
    %v320 = vpack.c.b16 %v317, %v316
    %v321 = vpack.c.b16 %v319, %v318
    %v325 = vsel %vm61, %v300, 0
    %327 = vmatprep.subr.bf16.mxu0 0
    %328 = vmatpush1.bf16.msra.mxu0 0
    %329 = vmatprep.subr.bf16.mxu0 0
    %330 = vmatpush1.bf16.msra.mxu0 0
    %331 = vmatprep.subr.bf16.mxu0 0
    %332 = vmatpush1.bf16.msra.mxu0 0
    %333 = vmatprep.subr.bf16.mxu0 0
    %334 = vmatpush1.bf16.msra.mxu0 0
    %335 = vmatprep.subr.bf16.mxu0 0
    %336 = vmatpush1.bf16.msra.mxu0 0
    %337 = vmatprep.subr.bf16.mxu0 0
    %338 = vmatpush1.bf16.msra.mxu0 0
    %339 = vmatprep.subr.bf16.mxu0 0
    %340 = vmatpush1.bf16.msra.mxu0 %v321
    %341 = vmatprep.subr.bf16.mxu0 0
    %342 = vmatpush1.bf16.msra.mxu0 %v320
    %343 = vmatprep.subr.bf16.mxu0 0
    %344 = vmatpush2.bf16.msra.mxu0 0
    %345 = vmatprep.subr.bf16.mxu0 0
    %346 = vmatpush2.bf16.msra.mxu0 0
    %347 = vmatprep.subr.bf16.mxu0 0
    %348 = vmatpush2.bf16.msra.mxu0 0
    %349 = vmatprep.subr.bf16.mxu0 0
    %350 = vmatpush2.bf16.msra.mxu0 0
    %351 = vmatprep.subr.bf16.mxu0 0
    %352 = vmatpush2.bf16.msra.mxu0 0
    %353 = vmatprep.subr.bf16.mxu0 0
    %354 = vmatpush2.bf16.msra.mxu0 0
    %355 = vmatprep.subr.bf16.mxu0 0
    %356 = vmatpush2.bf16.msra.mxu0 0
    %357 = vmatprep.subr.bf16.mxu0 0
    %358 = vmatpush2.bf16.msra.mxu0 0
    %359 = vmatprep.mubr.bf16.mxu0 0
    %360 = vmatmul.mubr.bf16.gmra.mxu0 %v325
    %v361 = vpop.f32.mrf.mxu0
    %v362 = vadd.f32 %v310, %v361
    %v363 = vpop.f32.mrf.mxu0
    %v364 = vpop.f32.mrf.mxu0
    %v365 = vpop.f32.mrf.mxu0
    %366 = vdwg.mxu0
    %v367 = vlaneseq
    %v368 = vand.u32 %v367, 127
    %v369 = vmax.f32 %v362, 0.0
    %vm370 = vcmp.ne.f32.partialorder %v362, %v362
    %v371 = vadd.f32 %v362, 0.0
    %v372 = vand.u32 2147483647, %v362
    %v373 = vsub.f32 0.0, %v372
    %v374 = vmul.f32 %v373, 1.442695
    %v375 = vpow.pop %v374
    %v376 = vadd.f32 %v375, 1.0
    %v377 = vlog2.pop %v376
    %v378 = vmul.f32 %v377, 0.6931472
    %v379 = vmul.f32 -0.5, %v375
    %v380 = vadd.f32 %v379, 1.0
    %v381 = vmul.f32 %v380, %v375
    %v382 = vand.u32 2147483647, %v375
    %vm383 = vcmp.lt.f32.partialorder %v382, 0.0004427343
    %v384 = vsel %vm383, %v381, %v378
    %v385 = vadd.f32 %v369, %v384
    %v386 = vsel %vm370, %v371, %v385
    %v387 = vadd.f32 %v386, 1.0
    %v388 = vmul.f32 %v362, 1.442695
    %v389 = vpow.pop %v388
    %vm390 = vcmp.lt.s32.totalorder %v368, 14
    %vm391 = vcmp.lt.s32.totalorder %v368, 28
    %v392 = vsel %vm391, %v389, %v362
    %v393 = vsel %vm390, %v387, %v392
    %394 = vst [vmem:[%s10] sm:$0xff] %v393
    // Predicated region
    $region38: #{protein_vae_forward.1} parent=1 // pred_check
      _
    $region39: #{protein_vae_forward.1} parent=1 // pred_check_branch
      %396 = sbr.rel (0) target = $region41
    $region40: #{protein_vae_forward.1} parent=1 // pred_region
      %s398 = ssub.s32 128, 128
      %399 = vsyncadd [#allocation3], %s398
      %s401 = sshll.u32 [#allocation2], 4
      %s402 = int_to_ptr.vmem [resolvable:$true] %s401
      %404 = dma.vmem_to_hbm [thread:$0]  %s402, 128, %s9, [#allocation3]
    $region41: #{protein_vae_forward.1} parent=1 // pred_fallthru
      _
    // Predicated region
    $region42: #{protein_vae_forward.1} parent=1 // pred_check
      _
    $region43: #{protein_vae_forward.1} parent=1 // pred_check_branch
      %406 = sbr.rel (0) target = $region45
    $region44: #{protein_vae_forward.1} parent=1 // pred_region
      _
    $region45: #{protein_vae_forward.1} parent=1 // pred_fallthru
      _
    // Predicated region
    $region46: #{protein_vae_forward.1} parent=1 // pred_check
      _
    $region47: #{protein_vae_forward.1} parent=1 // pred_check_branch
      %408 = sbr.rel (0) target = $region49
    $region48: #{protein_vae_forward.1} parent=1 // pred_region
      %409 = dma.done [#allocation3], 128
    $region49: #{protein_vae_forward.1} parent=1 // pred_fallthru
      _
    // Predicated region
    $region50: #{protein_vae_forward.1} parent=1 // pred_check
      _
    $region51: #{protein_vae_forward.1} parent=1 // pred_check_branch
      %411 = sbr.rel (0) target = $region53
    $region52: #{protein_vae_forward.1} parent=1 // pred_region
      _
    $region53: #{protein_vae_forward.1} parent=1 // pred_fallthru
      _
    %412 = vsyncpa [#allocation3], 1

</llo_original>
